<compile_context>
chip_gen: v6e
topology: v6e:2x2x1
jax: 0.10.0
libtpu: 0.0.40
codegen_flags: <defaults>
</compile_context>

<pallas_src>
import functools

import jax
import jax.numpy as jnp
import numpy as np
from jax.experimental import pallas as pl
from jax.experimental.pallas import tpu as pltpu


def _ca_kernel(x_ref, w1_ref, w2_ref, o_ref, sum_acc, max_acc, *,
               n_pixels, tile_p, acc_w, need_mask):
    """Grid = (N, num_pixel_tiles). x_ref block is (C, tile_p)."""
    p = pl.program_id(1)
    last = pl.num_programs(1) - 1
    n_chunks = tile_p // acc_w  # exact by construction

    # ---- init accumulators at the start of each batch element's pixel loop
    @pl.when(p == 0)
    def _init():
        sum_acc[...] = jnp.zeros(sum_acc.shape, sum_acc.dtype)
        max_acc[...] = jnp.full(max_acc.shape, -jnp.inf, max_acc.dtype)

    # ---- per-tile reduction: full-vreg VPU add/max over 128-lane chunks
    def accumulate(masked):
        s = sum_acc[...]                                   # (C, acc_w) f32
        m = max_acc[...]
        base = p * tile_p
        for i in range(n_chunks):
            c = x_ref[:, i * acc_w:(i + 1) * acc_w].astype(jnp.float32)
            if masked:
                col = (base + i * acc_w
                       + jax.lax.broadcasted_iota(jnp.int32, c.shape, 1))
                valid = col < n_pixels
                s = s + jnp.where(valid, c, 0.0)
                m = jnp.maximum(m, jnp.where(valid, c, -jnp.inf))
            else:
                s = s + c
                m = jnp.maximum(m, c)
        sum_acc[...] = s
        max_acc[...] = m

    if need_mask:
        # Only the last pixel tile can contain out-of-bounds lanes.
        @pl.when(p != last)
        def _fast():
            accumulate(False)

        @pl.when(p == last)
        def _tail():
            accumulate(True)
    else:
        accumulate(False)

    # ---- finalize: lane collapse (XLU, once per batch), shared MLP, sigmoid
    @pl.when(p == last)
    def _finalize():
        avg = jnp.sum(sum_acc[...], axis=1, keepdims=True) * (1.0 / float(n_pixels))
        mx = jnp.max(max_acc[...], axis=1, keepdims=True)          # (C, 1)

        def mlp(v):                                                # v: (C, 1)
            h = jnp.maximum(
                jnp.dot(w1_ref[...], v, preferred_element_type=jnp.float32), 0.0)
            return jnp.dot(w2_ref[...], h, preferred_element_type=jnp.float32)

        out = jax.nn.sigmoid(mlp(avg) + mlp(mx))                   # (C, 1)
        o_ref[...] = out.astype(o_ref.dtype)


def _select_tile_p(P, C, itemsize, tile_p=None):
    """Pick a pixel-tile size (multiple of 128, or the full P when P < 128)."""
    if tile_p is None:
        bytes_per_px = max(1, C * itemsize)
        desired = max(512, (2 << 20) // bytes_per_px)               # ~2 MiB block
        desired = min(desired, max(128, (8 << 20) // bytes_per_px))  # <= 8 MiB
        desired = min(desired, 8192)                                 # bound unroll
    else:
        desired = int(tile_p)
    desired = max(128, (desired // 128) * 128)
    if P < 128:
        return P                       # single full block (equals array dim)
    return max(128, min(desired, (P // 128) * 128))


def channel_attention(x_nchw, params, *, tile_p=None):
    """Pallas ChannelAttention forward. Returns (N, C, 1, 1) like the module."""
    N, C, H, W = x_nchw.shape
    w1, w2 = params["w1"], params["w2"]        # (Ch, C), (C, Ch)  (PyTorch layout)
    Ch = w1.shape[0]
    P = H * W

    # Free, contiguous reshape: channels on sublanes, pixels on lanes.
    x = x_nchw.reshape(N, C, P)

    itemsize = jnp.dtype(x.dtype).itemsize
    tp = _select_tile_p(P, C, itemsize, tile_p)
    n_p_tiles = pl.cdiv(P, tp)
    need_mask = (P % tp) != 0
    acc_w = min(128, tp)

    kernel = functools.partial(_ca_kernel, n_pixels=P, tile_p=tp,
                               acc_w=acc_w, need_mask=need_mask)

    w_bytes = (w1.size * jnp.dtype(w1.dtype).itemsize
               + w2.size * jnp.dtype(w2.dtype).itemsize)
    need_vmem = (2 * tp * C * itemsize      # double-buffered x tiles
                 + 2 * w_bytes              # resident weights (double-buffered)
                 + 2 * C * acc_w * 4        # accumulators
                 + (1 << 20))               # slack
    vmem_limit = int(min(32 << 20, max(4 << 20, need_vmem)))

    out = pl.pallas_call(
        kernel,
        out_shape=jax.ShapeDtypeStruct((N, C, 1), x.dtype),
        grid=(N, n_p_tiles),
        in_specs=[
            pl.BlockSpec((None, C, tp), lambda n, p: (n, 0, p)),   # x tiles
            pl.BlockSpec((Ch, C), lambda n, p: (0, 0)),            # w1 resident
            pl.BlockSpec((C, Ch), lambda n, p: (0, 0)),            # w2 resident
        ],
        out_specs=pl.BlockSpec((None, C, 1), lambda n, p: (n, 0, 0)),
        scratch_shapes=[
            pltpu.VMEM((C, acc_w), jnp.float32),   # running sum
            pltpu.VMEM((C, acc_w), jnp.float32),   # running max
        ],
        compiler_params=pltpu.CompilerParams(
            dimension_semantics=("parallel", "arbitrary"),
            vmem_limit_bytes=vmem_limit),
    )(x, w1, w2)

    # (N, C, 1) -> (N, C, 1, 1): free reshape (layout already matches).
    return out.reshape(N, C, 1, 1)


def init_params(key, in_channel, ratio=16):
    """Weights in the natural PyTorch layout (1x1-conv kernels squeezed):
    fc1.weight -> (hidden, C), fc2.weight -> (C, hidden). Both bias-free."""
    hidden = in_channel // ratio
    assert hidden >= 1, "in_channel must be >= ratio"
    k1, k2 = jax.random.split(key, 2)
    w1 = jax.random.normal(k1, (hidden, in_channel), jnp.float32) * 0.1
    w2 = jax.random.normal(k2, (in_channel, hidden), jnp.float32) * 0.1
    return dict(w1=w1, w2=w2)


def reference_forward(x_nchw, params):
    """Pure-JAX reference matching the PyTorch module."""
    xf = x_nchw.astype(jnp.float32)
    N, C, H, W = xf.shape
    avg = jnp.mean(xf, axis=(2, 3))          # (N, C)
    mx = jnp.max(xf, axis=(2, 3))            # (N, C)

    def mlp(v):                              # v: (N, C)
        return jnp.maximum(v @ params["w1"].T, 0.0) @ params["w2"].T

    out = jax.nn.sigmoid(mlp(avg) + mlp(mx))
    return out.reshape(N, C, 1, 1).astype(x_nchw.dtype)


if __name__ == "__main__":
    key = jax.random.PRNGKey(0)
    k1, k2, k3, k4 = jax.random.split(key, 4)

    # Case 1: common path — batch=2, C=64, 16x16 spatial (P=256), auto tiling
    # (single full pixel tile, 2 accumulation chunks, no masking).
    N, C, H, W = 2, 64, 16, 16
    x1 = jax.random.normal(k1, (N, C, H, W), jnp.float32)
    p1 = init_params(k2, in_channel=C, ratio=16)
    y1 = jax.block_until_ready(channel_attention(x1, p1))
    r1 = jax.block_until_ready(reference_forward(x1, p1))
    assert y1.shape == (N, C, 1, 1), y1.shape
    np.testing.assert_allclose(np.asarray(y1), np.asarray(r1),
                               rtol=1e-5, atol=1e-5)

    # Case 2: multi-tile accumulation + masked last tile — P=13*11=143 is not a
    # multiple of the 128-pixel tile, exercising init/accumulate/finalize and
    # the OOB mask without any host-side padding.
    N2, C2, H2, W2 = 2, 32, 13, 11
    x2 = jax.random.normal(k3, (N2, C2, H2, W2), jnp.float32)
    p2 = init_params(k4, in_channel=C2, ratio=16)
    y2 = jax.block_until_ready(channel_attention(x2, p2, tile_p=128))
    r2 = jax.block_until_ready(reference_forward(x2, p2))
    assert y2.shape == (N2, C2, 1, 1), y2.shape
    np.testing.assert_allclose(np.asarray(y2), np.asarray(r2),
                               rtol=1e-5, atol=1e-5)

    print("KERNEL_OK")
</pallas_src>

<mosaic_0001>
module attributes {stable_mosaic.version = 11 : i64} {
  func.func @_ca_kernel(%arg0: i32, %arg1: i32, %arg2: memref<1x64x256xf32, #tpu.memory_space<vmem>>, %arg3: memref<4x64xf32, #tpu.memory_space<vmem>>, %arg4: memref<64x4xf32, #tpu.memory_space<vmem>>, %arg5: memref<1x64x1xf32, #tpu.memory_space<vmem>>, %arg6: memref<64x128xf32, #tpu.memory_space<vmem>>, %arg7: memref<64x128xf32, #tpu.memory_space<vmem>>) attributes {dimension_semantics = [#tpu.dimension_semantics<parallel>, #tpu.dimension_semantics<arbitrary>], iteration_bounds = array<i64: 2, 1>, scalar_prefetch = 0 : i64, scratch_operands = 2 : i64, tpu.core_type = #tpu.core_type<tc>, window_params = [{transform_indices = @transform_0, window_bounds = array<i64: 1, 64, 256>}, {pipeline_mode = #tpu.pipeline_mode<synchronous>, transform_indices = @transform_1, window_bounds = array<i64: 4, 64>}, {pipeline_mode = #tpu.pipeline_mode<synchronous>, transform_indices = @transform_2, window_bounds = array<i64: 64, 4>}, {transform_indices = @transform_3, window_bounds = array<i64: 1, 64, 1>}]} {
    %c0_i32 = arith.constant 0 : i32
    %0 = arith.cmpi eq, %arg1, %c0_i32 : i32
    %1 = arith.extui %0 : i1 to i32
    %c0_i32_0 = arith.constant 0 : i32
    %2 = arith.cmpi ne, %1, %c0_i32_0 : i32
    scf.if %2 {
      %cst = arith.constant 0.000000e+00 : f32
      %18 = vector.broadcast %cst : f32 to vector<64x128xf32>
      %c0_15 = arith.constant 0 : index
      %c0_16 = arith.constant 0 : index
      %19 = vector.load %arg6[%c0_15, %c0_16] : memref<64x128xf32, #tpu.memory_space<vmem>>, vector<64x128xf32>
      tpu.vector_store %arg6[%c0_15, %c0_16], %18 {strides = array<i32>} : memref<64x128xf32, #tpu.memory_space<vmem>>, vector<64x128xf32>,
      %cst_17 = arith.constant 0xFF800000 : f32
      %20 = vector.broadcast %cst_17 : f32 to vector<64x128xf32>
      %c0_18 = arith.constant 0 : index
      %c0_19 = arith.constant 0 : index
      %21 = vector.load %arg7[%c0_18, %c0_19] : memref<64x128xf32, #tpu.memory_space<vmem>>, vector<64x128xf32>
      tpu.vector_store %arg7[%c0_18, %c0_19], %20 {strides = array<i32>} : memref<64x128xf32, #tpu.memory_space<vmem>>, vector<64x128xf32>,
    } else {
    }
    %c0 = arith.constant 0 : index
    %c0_1 = arith.constant 0 : index
    %3 = vector.load %arg6[%c0, %c0_1] : memref<64x128xf32, #tpu.memory_space<vmem>>, vector<64x128xf32>
    %c0_2 = arith.constant 0 : index
    %c0_3 = arith.constant 0 : index
    %4 = vector.load %arg7[%c0_2, %c0_3] : memref<64x128xf32, #tpu.memory_space<vmem>>, vector<64x128xf32>
    %c0_4 = arith.constant 0 : index
    %c0_5 = arith.constant 0 : index
    %c0_6 = arith.constant 0 : index
    %5 = vector.load %arg2[%c0_4, %c0_5, %c0_6] : memref<1x64x256xf32, #tpu.memory_space<vmem>>, vector<1x64x128xf32>
    %6 = vector.shape_cast %5 : vector<1x64x128xf32> to vector<64x128xf32>
    %7 = arith.addf %3, %6 : vector<64x128xf32>
    %8 = arith.maximumf %4, %6 : vector<64x128xf32>
    %c0_7 = arith.constant 0 : index
    %c0_8 = arith.constant 0 : index
    %c128 = arith.constant 128 : index
    %9 = vector.load %arg2[%c0_7, %c0_8, %c128] : memref<1x64x256xf32, #tpu.memory_space<vmem>>, vector<1x64x128xf32>
    %10 = vector.shape_cast %9 : vector<1x64x128xf32> to vector<64x128xf32>
    %11 = arith.addf %7, %10 : vector<64x128xf32>
    %12 = arith.maximumf %8, %10 : vector<64x128xf32>
    %c0_9 = arith.constant 0 : index
    %c0_10 = arith.constant 0 : index
    %13 = vector.load %arg6[%c0_9, %c0_10] : memref<64x128xf32, #tpu.memory_space<vmem>>, vector<64x128xf32>
    tpu.vector_store %arg6[%c0_9, %c0_10], %11 {strides = array<i32>} : memref<64x128xf32, #tpu.memory_space<vmem>>, vector<64x128xf32>,
    %c0_11 = arith.constant 0 : index
    %c0_12 = arith.constant 0 : index
    %14 = vector.load %arg7[%c0_11, %c0_12] : memref<64x128xf32, #tpu.memory_space<vmem>>, vector<64x128xf32>
    tpu.vector_store %arg7[%c0_11, %c0_12], %12 {strides = array<i32>} : memref<64x128xf32, #tpu.memory_space<vmem>>, vector<64x128xf32>,
    %c0_i32_13 = arith.constant 0 : i32
    %15 = arith.cmpi eq, %arg1, %c0_i32_13 : i32
    %16 = arith.extui %15 : i1 to i32
    %c0_i32_14 = arith.constant 0 : i32
    %17 = arith.cmpi ne, %16, %c0_i32_14 : i32
    scf.if %17 {
      %c0_15 = arith.constant 0 : index
      %c0_16 = arith.constant 0 : index
      %18 = vector.load %arg6[%c0_15, %c0_16] : memref<64x128xf32, #tpu.memory_space<vmem>>, vector<64x128xf32>
      %cst = arith.constant dense<0.000000e+00> : vector<64xf32>
      %19 = vector.multi_reduction <add>, %18, %cst [1] : vector<64x128xf32> to vector<64xf32>
      %20 = vector.shape_cast %19 : vector<64xf32> to vector<64x1xf32>
      %cst_17 = arith.constant 3.906250e-03 : f32
      %21 = vector.broadcast %cst_17 : f32 to vector<64x1xf32>
      %22 = arith.mulf %20, %21 : vector<64x1xf32>
      %c0_18 = arith.constant 0 : index
      %c0_19 = arith.constant 0 : index
      %23 = vector.load %arg7[%c0_18, %c0_19] : memref<64x128xf32, #tpu.memory_space<vmem>>, vector<64x128xf32>
      %cst_20 = arith.constant dense<0xFF800000> : vector<64xf32>
      %24 = vector.multi_reduction <maximumf>, %23, %cst_20 [1] : vector<64x128xf32> to vector<64xf32>
      %25 = vector.shape_cast %24 : vector<64xf32> to vector<64x1xf32>
      %c0_21 = arith.constant 0 : index
      %c0_22 = arith.constant 0 : index
      %26 = vector.load %arg3[%c0_21, %c0_22] : memref<4x64xf32, #tpu.memory_space<vmem>>, vector<4x64xf32>
      %cst_23 = arith.constant dense<0.000000e+00> : vector<4x1xf32>
      %27 = tpu.matmul %26, %22, %cst_23 {dimension_numbers = #tpu.dot_dimension_numbers<[1], [0], [0], [1], [0, 0, 1, 1], [], []>} : vector<4x64xf32>, vector<64x1xf32>, vector<4x1xf32> -> vector<4x1xf32>
      %cst_24 = arith.constant 0.000000e+00 : f32
      %28 = vector.broadcast %cst_24 : f32 to vector<4x1xf32>
      %29 = arith.maximumf %27, %28 : vector<4x1xf32>
      %c0_25 = arith.constant 0 : index
      %c0_26 = arith.constant 0 : index
      %30 = vector.load %arg4[%c0_25, %c0_26] : memref<64x4xf32, #tpu.memory_space<vmem>>, vector<64x4xf32>
      %cst_27 = arith.constant dense<0.000000e+00> : vector<64x1xf32>
      %31 = tpu.matmul %30, %29, %cst_27 {dimension_numbers = #tpu.dot_dimension_numbers<[1], [0], [0], [1], [0, 0, 1, 1], [], []>} : vector<64x4xf32>, vector<4x1xf32>, vector<64x1xf32> -> vector<64x1xf32>
      %c0_28 = arith.constant 0 : index
      %c0_29 = arith.constant 0 : index
      %32 = vector.load %arg3[%c0_28, %c0_29] : memref<4x64xf32, #tpu.memory_space<vmem>>, vector<4x64xf32>
      %cst_30 = arith.constant dense<0.000000e+00> : vector<4x1xf32>
      %33 = tpu.matmul %32, %25, %cst_30 {dimension_numbers = #tpu.dot_dimension_numbers<[1], [0], [0], [1], [0, 0, 1, 1], [], []>} : vector<4x64xf32>, vector<64x1xf32>, vector<4x1xf32> -> vector<4x1xf32>
      %cst_31 = arith.constant 0.000000e+00 : f32
      %34 = vector.broadcast %cst_31 : f32 to vector<4x1xf32>
      %35 = arith.maximumf %33, %34 : vector<4x1xf32>
      %c0_32 = arith.constant 0 : index
      %c0_33 = arith.constant 0 : index
      %36 = vector.load %arg4[%c0_32, %c0_33] : memref<64x4xf32, #tpu.memory_space<vmem>>, vector<64x4xf32>
      %cst_34 = arith.constant dense<0.000000e+00> : vector<64x1xf32>
      %37 = tpu.matmul %36, %35, %cst_34 {dimension_numbers = #tpu.dot_dimension_numbers<[1], [0], [0], [1], [0, 0, 1, 1], [], []>} : vector<64x4xf32>, vector<4x1xf32>, vector<64x1xf32> -> vector<64x1xf32>
      %38 = arith.addf %31, %37 : vector<64x1xf32>
      %39 = arith.negf %38 : vector<64x1xf32>
      %40 = math.exp %39 : vector<64x1xf32>
      %cst_35 = arith.constant 1.000000e+00 : f32
      %41 = vector.broadcast %cst_35 : f32 to vector<64x1xf32>
      %42 = arith.addf %41, %40 : vector<64x1xf32>
      %43 = arith.divf %41, %42 : vector<64x1xf32>
      %c0_36 = arith.constant 0 : index
      %c0_37 = arith.constant 0 : index
      %c0_38 = arith.constant 0 : index
      %44 = vector.load %arg5[%c0_36, %c0_37, %c0_38] : memref<1x64x1xf32, #tpu.memory_space<vmem>>, vector<1x64x1xf32>
      %45 = vector.shape_cast %44 : vector<1x64x1xf32> to vector<64x1xf32>
      %46 = vector.shape_cast %43 : vector<64x1xf32> to vector<1x64x1xf32>
      tpu.vector_store %arg5[%c0_36, %c0_37, %c0_38], %46 {strides = array<i32>} : memref<1x64x1xf32, #tpu.memory_space<vmem>>, vector<1x64x1xf32>,
    } else {
    }
    return
  }
  func.func @transform_0(%arg0: i32, %arg1: i32) -> (i32, i32, i32) {
    %c0_i32 = arith.constant 0 : i32
    %c0_i32_0 = arith.constant 0 : i32
    return %arg0, %c0_i32, %arg1 : i32, i32, i32
  }
  func.func @transform_1(%arg0: i32, %arg1: i32) -> (i32, i32) {
    %c0_i32 = arith.constant 0 : i32
    %c0_i32_0 = arith.constant 0 : i32
    %c0_i32_1 = arith.constant 0 : i32
    return %c0_i32, %c0_i32_0 : i32, i32
  }
  func.func @transform_2(%arg0: i32, %arg1: i32) -> (i32, i32) {
    %c0_i32 = arith.constant 0 : i32
    %c0_i32_0 = arith.constant 0 : i32
    %c0_i32_1 = arith.constant 0 : i32
    return %c0_i32, %c0_i32_0 : i32, i32
  }
  func.func @transform_3(%arg0: i32, %arg1: i32) -> (i32, i32, i32) {
    %c0_i32 = arith.constant 0 : i32
    %c0_i32_0 = arith.constant 0 : i32
    %c0_i32_1 = arith.constant 0 : i32
    return %arg0, %c0_i32, %c0_i32_0 : i32, i32, i32
  }
}

</mosaic_0001>

<llo_original>
// kernel: tpu_custom_call.1
$region0: #{tpu_custom_call.1}
  #allocation0 [shape = 'u32[]', space=smem, size = 0x4, offset = 0x4, fixed_abs, tag = 'smem constant byte address 0x4 - core index']
  #allocation1 [shape = 'u32[144,128]{1,0:T(1,128)}', space=vmem, size = 0x12000, scoped, tag = 'internal scratch']
  #allocation2 [shape = 'f32[64,128]{1,0:T(8,128)}', space=vmem, size = 0x8000, scoped, tag = 'scratch operand']
  #allocation3 [shape = 'f32[64,128]{1,0:T(8,128)}', space=vmem, size = 0x8000, scoped, tag = 'scratch operand']
  %s0 = inlined_call_operand.hbm [shape: f32[2,64,256], index: 0, kind: input, shape index: {}]
  %s1 = inlined_call_operand.vmem [shape: f32[4,64], index: 1, kind: input, shape index: {}]
  %s2 = inlined_call_operand.vmem [shape: f32[64,4], index: 2, kind: input, shape index: {}]
  %s3 = inlined_call_operand.vmem [shape: f32[2,64,1], index: 3, kind: output, shape index: {}]
  %s4 = sld [smem:[#allocation0]]
  $region57: #{tpu_custom_call.1} parent=0
    _
  %s6 = ssub.s32 1, %s4
  %s7 = scalar_select 0, %s6, %s4
  $region1: #{tpu_custom_call.1} parent=0
    #allocation4 [shape = 'u8[131072]{0}', space=vmem, size = 0x20000, scoped, tag = 'input window, operand 0']
    #allocation5 [shape = 's32[2]{0}', space=sflag, size = 0x8, scoped, tag = 'scoped memory for tpu_custom_call.1']
    %8 = vsyncpa [#allocation5], 0
    %s9 = scalar_lea.sflag [#allocation5], 1
    %10 = vsyncpa %s9, 0
    loop: start=0, step=1, limit=4
    $region2: #{tpu_custom_call.1} parent=1 // loop_pre_header
      _
    $region3: #{tpu_custom_call.1} parent=1 // loop_header
      %s12 = sphi 0, %s16
      %p13 = scmp.ge.s32.totalorder %s12, 4
      %s19 = sphi 0, %s31
      %s20 = sphi 0, %s27
      %s21 = sphi 0, %s19
      %s22 = sphi 0, %s20
      %s23 = sphi 0, %s21
      %s24 = sphi 0, %s22
      %s36 = sphi 0, %s38
      %s39 = sphi 0, %s36
      %s40 = sphi 0, %s39
      %s56 = sphi 0, %s40
      %s60 = sphi 0, %s60
      %s62 = sphi 0, %s60
      %s63 = sphi 0, %s62
      %s77 = sphi 0, %s63
      %s81 = sphi 0, %s81
      %s83 = sphi 0, %s81
      %s84 = sphi 0, %s83
      %s98 = sphi 0, %s84
      %s104 = sphi 0, %s106
      %s107 = sphi 0, %s104
      %s108 = sphi 0, %s107
      %s124 = sphi 0, %s108
    $region4: #{tpu_custom_call.1} parent=1 // loop_header_branch
      %15 = sbr.rel (%p13) target = $region8
    $region5: #{tpu_custom_call.1} parent=1 // loop_body
      %s17 = ssub.s32 %s12, 1
      %s18 = ssub.s32 %s12, 2
      %s25 = sadd.s32 1, %s20
      %p26 = scmp.ge.s32.totalorder %s25, 1
      %s27 = scalar_select %p26, 0, %s25
      %s28 = sadd.s32 1, %s19
      %s29 = scalar_select %p26, %s28, %s19
      %p30 = scmp.ge.s32.totalorder %s29, 2
      %s31 = scalar_select %p30, 0, %s29
      %s32 = ssub.s32 %s19, %s31
      %s33 = ssub.s32 %s20, %s27
      %s34 = sor.u32 %s32, %s33
      %p35 = scmp.eq.s32.totalorder %s34, 0
      %s37 = sadd.s32 %s36, 1
      %s38 = scalar_select %p35, %s36, %s37
      %p41 = pneg %p35
      %p42 = scmp.eq.s32.totalorder %s12, 1
      %p43 = por %p41, %p42
      %p44 = scmp.ne.s32.totalorder %s36, %s39
      %p45 = scmp.eq.s32.totalorder %s12, 0
      %p46 = por %p44, %p45
      %p47 = scmp.ne.s32.totalorder %s36, %s39
      %p48 = scmp.eq.s32.totalorder %s17, 1
      %p49 = por %p47, %p48
      %p50 = scmp.ne.s32.totalorder %s39, %s40
      %p51 = scmp.eq.s32.totalorder %s17, 0
      %p52 = por %p50, %p51
      %p53 = scmp.ne.s32.totalorder %s39, %s40
      %p54 = scmp.eq.s32.totalorder %s18, 1
      %p55 = por %p53, %p54
      %p57 = scmp.ne.s32.totalorder %s40, %s56
      %p58 = scmp.eq.s32.totalorder %s18, 0
      %p59 = por %p57, %p58
      %s61 = sadd.s32 %s60, 1
      %p64 = scmp.eq.s32.totalorder %s12, 1
      %p65 = scmp.ne.s32.totalorder %s60, %s62
      %p66 = scmp.eq.s32.totalorder %s12, 0
      %p67 = por %p65, %p66
      %p68 = scmp.ne.s32.totalorder %s60, %s62
      %p69 = scmp.eq.s32.totalorder %s17, 1
      %p70 = por %p68, %p69
      %p71 = scmp.ne.s32.totalorder %s62, %s63
      %p72 = scmp.eq.s32.totalorder %s17, 0
      %p73 = por %p71, %p72
      %p74 = scmp.ne.s32.totalorder %s62, %s63
      %p75 = scmp.eq.s32.totalorder %s18, 1
      %p76 = por %p74, %p75
      %p78 = scmp.ne.s32.totalorder %s63, %s77
      %p79 = scmp.eq.s32.totalorder %s18, 0
      %p80 = por %p78, %p79
      %s82 = sadd.s32 %s81, 1
      %p85 = scmp.eq.s32.totalorder %s12, 1
      %p86 = scmp.ne.s32.totalorder %s81, %s83
      %p87 = scmp.eq.s32.totalorder %s12, 0
      %p88 = por %p86, %p87
      %p89 = scmp.ne.s32.totalorder %s81, %s83
      %p90 = scmp.eq.s32.totalorder %s17, 1
      %p91 = por %p89, %p90
      %p92 = scmp.ne.s32.totalorder %s83, %s84
      %p93 = scmp.eq.s32.totalorder %s17, 0
      %p94 = por %p92, %p93
      %p95 = scmp.ne.s32.totalorder %s83, %s84
      %p96 = scmp.eq.s32.totalorder %s18, 1
      %p97 = por %p95, %p96
      %p99 = scmp.ne.s32.totalorder %s84, %s98
      %p100 = scmp.eq.s32.totalorder %s18, 0
      %p101 = por %p99, %p100
      %s102 = ssub.s32 %s19, %s31
      %p103 = scmp.eq.s32.totalorder %s102, 0
      %s105 = sadd.s32 %s104, 1
      %s106 = scalar_select %p103, %s104, %s105
      %p109 = pneg %p103
      %p110 = scmp.eq.s32.totalorder %s12, 1
      %p111 = por %p109, %p110
      %p112 = scmp.ne.s32.totalorder %s104, %s107
      %p113 = scmp.eq.s32.totalorder %s12, 0
      %p114 = por %p112, %p113
      %p115 = scmp.ne.s32.totalorder %s104, %s107
      %p116 = scmp.eq.s32.totalorder %s17, 1
      %p117 = por %p115, %p116
      %p118 = scmp.ne.s32.totalorder %s107, %s108
      %p119 = scmp.eq.s32.totalorder %s17, 0
      %p120 = por %p118, %p119
      %p121 = scmp.ne.s32.totalorder %s107, %s108
      %p122 = scmp.eq.s32.totalorder %s18, 1
      %p123 = por %p121, %p122
      %p125 = scmp.ne.s32.totalorder %s108, %s124
      %p126 = scmp.eq.s32.totalorder %s18, 0
      %p127 = por %p125, %p126
      %p128 = scmp.le.s32.totalorder 1, %s12
      %p129 = scmp.lt.s32.totalorder %s12, 3
      %p130 = pnand %p128, %p129
      %p131 = pneg %p130
      // Predicated region
      $region9: #{tpu_custom_call.1} parent=5 // pred_check
        _
      $region10: #{tpu_custom_call.1} parent=5 // pred_check_branch
        %133 = sbr.rel (%p130) target = $region12
      $region11: #{tpu_custom_call.1} parent=5 // pred_region
        %s134 = ssub.s32 %s12, 1
        // Predicated region
        $region13: #{tpu_custom_call.1} parent=11 // pred_check
          %p135 = pneg %p73
        $region14: #{tpu_custom_call.1} parent=11 // pred_check_branch
          %137 = sbr.rel (%p135) target = $region16
        $region15: #{tpu_custom_call.1} parent=11 // pred_region
          _
        $region16: #{tpu_custom_call.1} parent=11 // pred_fallthru
          _
        // Predicated region
        $region17: #{tpu_custom_call.1} parent=11 // pred_check
          %p138 = pneg %p94
        $region18: #{tpu_custom_call.1} parent=11 // pred_check_branch
          %140 = sbr.rel (%p138) target = $region20
        $region19: #{tpu_custom_call.1} parent=11 // pred_region
          _
        $region20: #{tpu_custom_call.1} parent=11 // pred_fallthru
          _
      $region12: #{tpu_custom_call.1} parent=5 // pred_fallthru
        _
      %p141 = scmp.lt.s32.totalorder %s12, 2
      // Predicated region
      $region21: #{tpu_custom_call.1} parent=5 // pred_check
        %p142 = pneg %p141
      $region22: #{tpu_custom_call.1} parent=5 // pred_check_branch
        %144 = sbr.rel (%p142) target = $region24
      $region23: #{tpu_custom_call.1} parent=5 // pred_region
        // Predicated region
        $region25: #{tpu_custom_call.1} parent=23 // pred_check
          %p145 = pneg %p46
        $region26: #{tpu_custom_call.1} parent=23 // pred_check_branch
          %147 = sbr.rel (%p145) target = $region28
        $region27: #{tpu_custom_call.1} parent=23 // pred_region
          %s148 = sand.u32 %s36, 1
          %s149 = scalar_lea.sflag [#allocation5], %s148
          %s150 = sand.u32 %s36, 1
          %s151 = smul.addr %s150, 128
          %s152 = scalar_lea.vmem [#allocation4], %s151
          %s153 = smul.u32 2, %s20
          %s155 = ssub.s32 2048, 2048
          %156 = vsyncadd %s149, %s155
          %s157 = smul.addr %s19, 16
          %s158 = sadd.s32 %s153, %s157
          %s159 = smul.addr %s158, 128
          %s160 = scalar_lea.hbm %s0, %s159
          %s161 = sshll.u32 %s152, 4
          %s162 = int_to_ptr.vmem [resolvable:$true] %s161
          %167 = dma.hbm_to_vmem [thread:$0]  %s160, 2048, %s162, %s149, 256, 256, 16
        $region28: #{tpu_custom_call.1} parent=23 // pred_fallthru
          _
      $region24: #{tpu_custom_call.1} parent=5 // pred_fallthru
        _
      %p168 = scmp.le.s32.totalorder 1, %s12
      %p169 = scmp.lt.s32.totalorder %s12, 3
      %p170 = pnand %p168, %p169
      %p171 = pneg %p170
      // Predicated region
      $region29: #{tpu_custom_call.1} parent=5 // pred_check
        _
      $region30: #{tpu_custom_call.1} parent=5 // pred_check_branch
        %173 = sbr.rel (%p170) target = $region32
      $region31: #{tpu_custom_call.1} parent=5 // pred_region
        %s174 = ssub.s32 %s12, 1
        %s175 = sand.u32 %s39, 1
        %s176 = scalar_lea.sflag [#allocation5], %s175
        %s177 = sand.u32 %s39, 1
        %s178 = smul.addr %s177, 128
        %s179 = scalar_lea.vmem [#allocation4], %s178
        // Predicated region
        $region33: #{tpu_custom_call.1} parent=31 // pred_check
          %p180 = pneg %p52
        $region34: #{tpu_custom_call.1} parent=31 // pred_check_branch
          %182 = sbr.rel (%p180) target = $region36
        $region35: #{tpu_custom_call.1} parent=31 // pred_region
          %183 = dma.done %s176, 2048
        $region36: #{tpu_custom_call.1} parent=31 // pred_fallthru
          _
        %s184 = sand.u32 %s39, 1
        %s185 = scalar_lea.sflag [#allocation5], %s184
        %s186 = sand.u32 %s39, 1
        %s187 = smul.addr %s186, 128
        %s188 = scalar_lea.vmem [#allocation4], %s187
        %p189 = pneg %p52
        %p190 = pneg %p49
        %p191 = pneg %p73
        %p192 = pneg %p70
        %p193 = pneg %p94
        %p194 = pneg %p91
        %p195 = pneg %p120
        %p196 = pneg %p117
        %p197 = scmp.lt.s32.totalorder %s21, 1
        %s198 = scalar_select %p197, %s21, 1
        %s199 = smul.addr %s198, 8
        %s200 = smul.addr %s199, 8
        %s201 = scalar_lea.vmem %s3, %s200
        %s202 = smul.u32 2, %s22
        %p203 = scmp.lt.s32.totalorder %s21, 1
        %s204 = scalar_select %p203, %s21, 1
        %s205 = smul.addr %s204, 8
        %s206 = smul.addr %s205, 8
        %s207 = scalar_lea.vmem %s3, %s206
        %p208 = scmp.eq.s32.totalorder %s22, 0
        // Predicated region
        $region37: #{tpu_custom_call.1} parent=31 // pred_check
          %p209 = pneg %p208
        $region38: #{tpu_custom_call.1} parent=31 // pred_check_branch
          %211 = sbr.rel (%p209) target = $region40
        $region39: #{tpu_custom_call.1} parent=31 // pred_region
          %212 = vst [vmem:[#allocation2] sm:$0xff] 0.0
          %213 = vst [vmem:[#allocation2 + $0x8] sm:$0xff] 0.0
          %214 = vst [vmem:[#allocation2 + $0x10] sm:$0xff] 0.0
          %215 = vst [vmem:[#allocation2 + $0x18] sm:$0xff] 0.0
          %216 = vst [vmem:[#allocation2 + $0x20] sm:$0xff] 0.0
          %217 = vst [vmem:[#allocation2 + $0x28] sm:$0xff] 0.0
          %218 = vst [vmem:[#allocation2 + $0x30] sm:$0xff] 0.0
          %219 = vst [vmem:[#allocation2 + $0x38] sm:$0xff] 0.0
          %220 = vst [vmem:[#allocation3] sm:$0xff] -inf
          %221 = vst [vmem:[#allocation3 + $0x8] sm:$0xff] -inf
          %222 = vst [vmem:[#allocation3 + $0x10] sm:$0xff] -inf
          %223 = vst [vmem:[#allocation3 + $0x18] sm:$0xff] -inf
          %224 = vst [vmem:[#allocation3 + $0x20] sm:$0xff] -inf
          %225 = vst [vmem:[#allocation3 + $0x28] sm:$0xff] -inf
          %226 = vst [vmem:[#allocation3 + $0x30] sm:$0xff] -inf
          %227 = vst [vmem:[#allocation3 + $0x38] sm:$0xff] -inf
        $region40: #{tpu_custom_call.1} parent=31 // pred_fallthru
          _
        %v228 = vld [vmem:[#allocation2] sm:$0xff]
        %v229 = vld [vmem:[#allocation2 + $0x8] sm:$0xff]
        %v230 = vld [vmem:[#allocation2 + $0x10] sm:$0xff]
        %v231 = vld [vmem:[#allocation2 + $0x18] sm:$0xff]
        %v232 = vld [vmem:[#allocation2 + $0x20] sm:$0xff]
        %v233 = vld [vmem:[#allocation2 + $0x28] sm:$0xff]
        %v234 = vld [vmem:[#allocation2 + $0x30] sm:$0xff]
        %v235 = vld [vmem:[#allocation2 + $0x38] sm:$0xff]
        %v236 = vld [vmem:[#allocation3] sm:$0xff]
        %v237 = vld [vmem:[#allocation3 + $0x8] sm:$0xff]
        %v238 = vld [vmem:[#allocation3 + $0x10] sm:$0xff]
        %v239 = vld [vmem:[#allocation3 + $0x18] sm:$0xff]
        %v240 = vld [vmem:[#allocation3 + $0x20] sm:$0xff]
        %v241 = vld [vmem:[#allocation3 + $0x28] sm:$0xff]
        %v242 = vld [vmem:[#allocation3 + $0x30] sm:$0xff]
        %v243 = vld [vmem:[#allocation3 + $0x38] sm:$0xff]
        %v244 = vld [vmem:[%s179] sm:$0xff]
        %v245 = vld [vmem:[%s179 + $0x10] sm:$0xff]
        %v246 = vld [vmem:[%s179 + $0x20] sm:$0xff]
        %v247 = vld [vmem:[%s179 + $0x30] sm:$0xff]
        %v248 = vld [vmem:[%s179 + $0x40] sm:$0xff]
        %v249 = vld [vmem:[%s179 + $0x50] sm:$0xff]
        %v250 = vld [vmem:[%s179 + $0x60] sm:$0xff]
        %v251 = vld [vmem:[%s179 + $0x70] sm:$0xff]
        %v252 = vadd.f32 %v228, %v244
        %v253 = vadd.f32 %v229, %v245
        %v254 = vadd.f32 %v230, %v246
        %v255 = vadd.f32 %v231, %v247
        %v256 = vadd.f32 %v232, %v248
        %v257 = vadd.f32 %v233, %v249
        %v258 = vadd.f32 %v234, %v250
        %v259 = vadd.f32 %v235, %v251
        %v260 = vmax.f32 %v236, %v244
        %v261 = vmax.f32 %v237, %v245
        %v262 = vmax.f32 %v238, %v246
        %v263 = vmax.f32 %v239, %v247
        %v264 = vmax.f32 %v240, %v248
        %v265 = vmax.f32 %v241, %v249
        %v266 = vmax.f32 %v242, %v250
        %v267 = vmax.f32 %v243, %v251
        %v268 = vld [vmem:[%s179 + $0x8] sm:$0xff]
        %v269 = vld [vmem:[%s179 + $0x18] sm:$0xff]
        %v270 = vld [vmem:[%s179 + $0x28] sm:$0xff]
        %v271 = vld [vmem:[%s179 + $0x38] sm:$0xff]
        %v272 = vld [vmem:[%s179 + $0x48] sm:$0xff]
        %v273 = vld [vmem:[%s179 + $0x58] sm:$0xff]
        %v274 = vld [vmem:[%s179 + $0x68] sm:$0xff]
        %v275 = vld [vmem:[%s179 + $0x78] sm:$0xff]
        %v276 = vadd.f32 %v252, %v268
        %v277 = vadd.f32 %v253, %v269
        %v278 = vadd.f32 %v254, %v270
        %v279 = vadd.f32 %v255, %v271
        %v280 = vadd.f32 %v256, %v272
        %v281 = vadd.f32 %v257, %v273
        %v282 = vadd.f32 %v258, %v274
        %v283 = vadd.f32 %v259, %v275
        %v284 = vmax.f32 %v260, %v268
        %v285 = vmax.f32 %v261, %v269
        %v286 = vmax.f32 %v262, %v270
        %v287 = vmax.f32 %v263, %v271
        %v288 = vmax.f32 %v264, %v272
        %v289 = vmax.f32 %v265, %v273
        %v290 = vmax.f32 %v266, %v274
        %v291 = vmax.f32 %v267, %v275
        %292 = vst [vmem:[#allocation2] sm:$0xff] %v276
        %293 = vst [vmem:[#allocation2 + $0x8] sm:$0xff] %v277
        %294 = vst [vmem:[#allocation2 + $0x10] sm:$0xff] %v278
        %295 = vst [vmem:[#allocation2 + $0x18] sm:$0xff] %v279
        %296 = vst [vmem:[#allocation2 + $0x20] sm:$0xff] %v280
        %297 = vst [vmem:[#allocation2 + $0x28] sm:$0xff] %v281
        %298 = vst [vmem:[#allocation2 + $0x30] sm:$0xff] %v282
        %299 = vst [vmem:[#allocation2 + $0x38] sm:$0xff] %v283
        %300 = vst [vmem:[#allocation3] sm:$0xff] %v284
        %301 = vst [vmem:[#allocation3 + $0x8] sm:$0xff] %v285
        %302 = vst [vmem:[#allocation3 + $0x10] sm:$0xff] %v286
        %303 = vst [vmem:[#allocation3 + $0x18] sm:$0xff] %v287
        %304 = vst [vmem:[#allocation3 + $0x20] sm:$0xff] %v288
        %305 = vst [vmem:[#allocation3 + $0x28] sm:$0xff] %v289
        %306 = vst [vmem:[#allocation3 + $0x30] sm:$0xff] %v290
        %307 = vst [vmem:[#allocation3 + $0x38] sm:$0xff] %v291
        // Predicated region
        $region41: #{tpu_custom_call.1} parent=31 // pred_check
          %p308 = pneg %p208
        $region42: #{tpu_custom_call.1} parent=31 // pred_check_branch
          %310 = sbr.rel (%p308) target = $region44
        $region43: #{tpu_custom_call.1} parent=31 // pred_region
          %v311 = vld [vmem:[#allocation2] sm:$0xff]
          %v312 = vld [vmem:[#allocation2 + $0x8] sm:$0xff]
          %v313 = vld [vmem:[#allocation2 + $0x10] sm:$0xff]
          %v314 = vld [vmem:[#allocation2 + $0x18] sm:$0xff]
          %v315 = vld [vmem:[#allocation2 + $0x20] sm:$0xff]
          %v316 = vld [vmem:[#allocation2 + $0x28] sm:$0xff]
          %v317 = vld [vmem:[#allocation2 + $0x30] sm:$0xff]
          %v318 = vld [vmem:[#allocation2 + $0x38] sm:$0xff]
          %319 = vadd.xlane.f32.xlu0 %v311
          %v320 = vpop.xlane.xlu0 %319
          %321 = vadd.xlane.f32.xlu0 %v312
          %v322 = vpop.xlane.xlu0 %321
          %323 = vadd.xlane.f32.xlu0 %v313
          %v324 = vpop.xlane.xlu0 %323
          %325 = vadd.xlane.f32.xlu0 %v314
          %v326 = vpop.xlane.xlu0 %325
          %327 = vadd.xlane.f32.xlu0 %v315
          %v328 = vpop.xlane.xlu0 %327
          %329 = vadd.xlane.f32.xlu0 %v316
          %v330 = vpop.xlane.xlu0 %329
          %331 = vadd.xlane.f32.xlu0 %v317
          %v332 = vpop.xlane.xlu0 %331
          %333 = vadd.xlane.f32.xlu0 %v318
          %v334 = vpop.xlane.xlu0 %333
          %v335 = vmul.f32 %v320, 0.00390625
          %v336 = vmul.f32 %v322, 0.00390625
          %v337 = vmul.f32 %v324, 0.00390625
          %v338 = vmul.f32 %v326, 0.00390625
          %v339 = vmul.f32 %v328, 0.00390625
          %v340 = vmul.f32 %v330, 0.00390625
          %v341 = vmul.f32 %v332, 0.00390625
          %v342 = vmul.f32 %v334, 0.00390625
          %v343 = vld [vmem:[#allocation3] sm:$0xff]
          %v344 = vld [vmem:[#allocation3 + $0x8] sm:$0xff]
          %v345 = vld [vmem:[#allocation3 + $0x10] sm:$0xff]
          %v346 = vld [vmem:[#allocation3 + $0x18] sm:$0xff]
          %v347 = vld [vmem:[#allocation3 + $0x20] sm:$0xff]
          %v348 = vld [vmem:[#allocation3 + $0x28] sm:$0xff]
          %v349 = vld [vmem:[#allocation3 + $0x30] sm:$0xff]
          %v350 = vld [vmem:[#allocation3 + $0x38] sm:$0xff]
          %351 = vmax.xlane.f32.xlu0 %v343
          %v352 = vpop.xlane.xlu0 %351
          %353 = vmax.xlane.f32.xlu0 %v344
          %v354 = vpop.xlane.xlu0 %353
          %355 = vmax.xlane.f32.xlu0 %v345
          %v356 = vpop.xlane.xlu0 %355
          %357 = vmax.xlane.f32.xlu0 %v346
          %v358 = vpop.xlane.xlu0 %357
          %359 = vmax.xlane.f32.xlu0 %v347
          %v360 = vpop.xlane.xlu0 %359
          %361 = vmax.xlane.f32.xlu0 %v348
          %v362 = vpop.xlane.xlu0 %361
          %363 = vmax.xlane.f32.xlu0 %v349
          %v364 = vpop.xlane.xlu0 %363
          %365 = vmax.xlane.f32.xlu0 %v350
          %v366 = vpop.xlane.xlu0 %365
          %v367 = vld [vmem:[%s1] sm:$0xf]
          %vm368 = vcmask 523264
          %v370 = vsel %vm368, %v367, 0
          %372 = vmatprep.subr.mxu0 0.0
          %373 = vmatpush1.msra.mxu0 0.0
          %374 = vmatprep.subr.mxu0 0.0
          %375 = vmatpush1.msra.mxu0 0.0
          %376 = vmatprep.subr.mxu0 0.0
          %377 = vmatpush1.msra.mxu0 0.0
          %378 = vmatprep.subr.mxu0 0.0
          %379 = vmatpush1.msra.mxu0 0.0
          %380 = vmatprep.subr.mxu0 0.0
          %381 = vmatpush1.msra.mxu0 0.0
          %382 = vmatprep.subr.mxu0 0.0
          %383 = vmatpush1.msra.mxu0 0.0
          %384 = vmatprep.subr.mxu0 0.0
          %385 = vmatpush1.msra.mxu0 0.0
          %386 = vmatprep.subr.mxu0 0.0
          %387 = vmatpush1.msra.mxu0 0.0
          %388 = vmatprep.subr.mxu0 0.0
          %389 = vmatpush1.msra.mxu0 %v342
          %390 = vmatprep.subr.mxu0 0.0
          %391 = vmatpush1.msra.mxu0 %v341
          %392 = vmatprep.subr.mxu0 0.0
          %393 = vmatpush1.msra.mxu0 %v340
          %394 = vmatprep.subr.mxu0 0.0
          %395 = vmatpush1.msra.mxu0 %v339
          %396 = vmatprep.subr.mxu0 0.0
          %397 = vmatpush1.msra.mxu0 %v338
          %398 = vmatprep.subr.mxu0 0.0
          %399 = vmatpush1.msra.mxu0 %v337
          %400 = vmatprep.subr.mxu0 0.0
          %401 = vmatpush1.msra.mxu0 %v336
          %402 = vmatprep.subr.mxu0 0.0
          %403 = vmatpush1.msra.mxu0 %v335
          %404 = vmatprep.subr.mxu0 0.0
          %405 = vmatpush2.msra.mxu0 0.0
          %406 = vmatprep.subr.mxu0 0.0
          %407 = vmatpush2.msra.mxu0 0.0
          %408 = vmatprep.subr.mxu0 0.0
          %409 = vmatpush2.msra.mxu0 0.0
          %410 = vmatprep.subr.mxu0 0.0
          %411 = vmatpush2.msra.mxu0 0.0
          %412 = vmatprep.subr.mxu0 0.0
          %413 = vmatpush2.msra.mxu0 0.0
          %414 = vmatprep.subr.mxu0 0.0
          %415 = vmatpush2.msra.mxu0 0.0
          %416 = vmatprep.subr.mxu0 0.0
          %417 = vmatpush2.msra.mxu0 0.0
          %418 = vmatprep.subr.mxu0 0.0
          %419 = vmatpush2.msra.mxu0 0.0
          %420 = vmatprep.subr.mxu0 0.0
          %421 = vmatpush2.msra.mxu0 0.0
          %422 = vmatprep.subr.mxu0 0.0
          %423 = vmatpush2.msra.mxu0 0.0
          %424 = vmatprep.subr.mxu0 0.0
          %425 = vmatpush2.msra.mxu0 0.0
          %426 = vmatprep.subr.mxu0 0.0
          %427 = vmatpush2.msra.mxu0 0.0
          %428 = vmatprep.subr.mxu0 0.0
          %429 = vmatpush2.msra.mxu0 0.0
          %430 = vmatprep.subr.mxu0 0.0
          %431 = vmatpush2.msra.mxu0 0.0
          %432 = vmatprep.subr.mxu0 0.0
          %433 = vmatpush2.msra.mxu0 0.0
          %434 = vmatprep.subr.mxu0 0.0
          %435 = vmatpush2.msra.mxu0 0.0
          %436 = vmatprep.mubr.f32.mxu0 0.0
          %437 = vmatmul.mubr.f32.gmra.mxu0 %v370
          %v438 = vpop.f32.mrf.mxu0
          %v439 = vadd.f32 0.0, %v438
          %v440 = vpop.f32.mrf.mxu0
          %441 = vdwg.mxu0
          %v442 = vmax.f32 %v439, 0.0
          %v443 = vld [vmem:[%s2] sm:$0xff]
          %v444 = vld [vmem:[%s2 + $0x8] sm:$0xff]
          %v445 = vld [vmem:[%s2 + $0x10] sm:$0xff]
          %v446 = vld [vmem:[%s2 + $0x18] sm:$0xff]
          %v447 = vld [vmem:[%s2 + $0x20] sm:$0xff]
          %v448 = vld [vmem:[%s2 + $0x28] sm:$0xff]
          %v449 = vld [vmem:[%s2 + $0x30] sm:$0xff]
          %v450 = vld [vmem:[%s2 + $0x38] sm:$0xff]
          %451 = vmatprep.subr.mxu0 0.0
          %452 = vmatpush1.msra.mxu0 0.0
          %453 = vmatprep.subr.mxu0 0.0
          %454 = vmatpush1.msra.mxu0 0.0
          %455 = vmatprep.subr.mxu0 0.0
          %456 = vmatpush1.msra.mxu0 0.0
          %457 = vmatprep.subr.mxu0 0.0
          %458 = vmatpush1.msra.mxu0 0.0
          %459 = vmatprep.subr.mxu0 0.0
          %460 = vmatpush1.msra.mxu0 0.0
          %461 = vmatprep.subr.mxu0 0.0
          %462 = vmatpush1.msra.mxu0 0.0
          %463 = vmatprep.subr.mxu0 0.0
          %464 = vmatpush1.msra.mxu0 0.0
          %465 = vmatprep.subr.mxu0 0.0
          %466 = vmatpush1.msra.mxu0 0.0
          %467 = vmatprep.subr.mxu0 0.0
          %468 = vmatpush1.msra.mxu0 %v366
          %469 = vmatprep.subr.mxu0 0.0
          %470 = vmatpush1.msra.mxu0 %v364
          %471 = vmatprep.subr.mxu0 0.0
          %472 = vmatpush1.msra.mxu0 %v362
          %473 = vmatprep.subr.mxu0 0.0
          %474 = vmatpush1.msra.mxu0 %v360
          %475 = vmatprep.subr.mxu0 0.0
          %476 = vmatpush1.msra.mxu0 %v358
          %477 = vmatprep.subr.mxu0 0.0
          %478 = vmatpush1.msra.mxu0 %v356
          %479 = vmatprep.subr.mxu0 0.0
          %480 = vmatpush1.msra.mxu0 %v354
          %481 = vmatprep.subr.mxu0 0.0
          %482 = vmatpush1.msra.mxu0 %v352
          %483 = vmatprep.subr.mxu0 0.0
          %484 = vmatpush2.msra.mxu0 0.0
          %485 = vmatprep.subr.mxu0 0.0
          %486 = vmatpush2.msra.mxu0 0.0
          %487 = vmatprep.subr.mxu0 0.0
          %488 = vmatpush2.msra.mxu0 0.0
          %489 = vmatprep.subr.mxu0 0.0
          %490 = vmatpush2.msra.mxu0 0.0
          %491 = vmatprep.subr.mxu0 0.0
          %492 = vmatpush2.msra.mxu0 0.0
          %493 = vmatprep.subr.mxu0 0.0
          %494 = vmatpush2.msra.mxu0 0.0
          %495 = vmatprep.subr.mxu0 0.0
          %496 = vmatpush2.msra.mxu0 0.0
          %497 = vmatprep.subr.mxu0 0.0
          %498 = vmatpush2.msra.mxu0 0.0
          %499 = vmatprep.subr.mxu0 0.0
          %500 = vmatpush2.msra.mxu0 0.0
          %501 = vmatprep.subr.mxu0 0.0
          %502 = vmatpush2.msra.mxu0 0.0
          %503 = vmatprep.subr.mxu0 0.0
          %504 = vmatpush2.msra.mxu0 0.0
          %505 = vmatprep.subr.mxu0 0.0
          %506 = vmatpush2.msra.mxu0 0.0
          %507 = vmatprep.subr.mxu0 0.0
          %508 = vmatpush2.msra.mxu0 0.0
          %509 = vmatprep.subr.mxu0 0.0
          %510 = vmatpush2.msra.mxu0 0.0
          %511 = vmatprep.subr.mxu0 0.0
          %512 = vmatpush2.msra.mxu0 0.0
          %513 = vmatprep.subr.mxu0 0.0
          %514 = vmatpush2.msra.mxu0 0.0
          %515 = vmatprep.mubr.f32.mxu0 0.0
          %516 = vmatmul.mubr.f32.gmra.mxu0 %v370
          %v517 = vpop.f32.mrf.mxu0
          %v518 = vadd.f32 0.0, %v517
          %v519 = vpop.f32.mrf.mxu0
          %520 = vdwg.mxu0
          %v521 = vmax.f32 %v518, 0.0
          %vm522 = vcmask 31744
          %v524 = vsel %vm522, %v443, 0
          %v527 = vsel %vm522, %v444, 0
          %v530 = vsel %vm522, %v445, 0
          %v533 = vsel %vm522, %v446, 0
          %v536 = vsel %vm522, %v447, 0
          %v539 = vsel %vm522, %v448, 0
          %v542 = vsel %vm522, %v449, 0
          %v545 = vsel %vm522, %v450, 0
          %vm547 = vcmask 1043456
          %v549 = vsel %vm547, %v521, 0
          %551 = vmatprep.subr.mxu0 0.0
          %552 = vmatpush1.msra.mxu0 0.0
          %553 = vmatprep.subr.mxu0 0.0
          %554 = vmatpush1.msra.mxu0 0.0
          %555 = vmatprep.subr.mxu0 0.0
          %556 = vmatpush1.msra.mxu0 0.0
          %557 = vmatprep.subr.mxu0 0.0
          %558 = vmatpush1.msra.mxu0 0.0
          %559 = vmatprep.subr.mxu0 0.0
          %560 = vmatpush1.msra.mxu0 0.0
          %561 = vmatprep.subr.mxu0 0.0
          %562 = vmatpush1.msra.mxu0 0.0
          %563 = vmatprep.subr.mxu0 0.0
          %564 = vmatpush1.msra.mxu0 0.0
          %565 = vmatprep.subr.mxu0 0.0
          %566 = vmatpush1.msra.mxu0 0.0
          %567 = vmatprep.subr.mxu0 0.0
          %568 = vmatpush1.msra.mxu0 0.0
          %569 = vmatprep.subr.mxu0 0.0
          %570 = vmatpush1.msra.mxu0 0.0
          %571 = vmatprep.subr.mxu0 0.0
          %572 = vmatpush1.msra.mxu0 0.0
          %573 = vmatprep.subr.mxu0 0.0
          %574 = vmatpush1.msra.mxu0 0.0
          %575 = vmatprep.subr.mxu0 0.0
          %576 = vmatpush1.msra.mxu0 0.0
          %577 = vmatprep.subr.mxu0 0.0
          %578 = vmatpush1.msra.mxu0 0.0
          %579 = vmatprep.subr.mxu0 0.0
          %580 = vmatpush1.msra.mxu0 0.0
          %581 = vmatprep.subr.mxu0 0.0
          %582 = vmatpush1.msra.mxu0 %v549
          %583 = vmatprep.subr.mxu0 0.0
          %584 = vmatpush2.msra.mxu0 0.0
          %585 = vmatprep.subr.mxu0 0.0
          %586 = vmatpush2.msra.mxu0 0.0
          %587 = vmatprep.subr.mxu0 0.0
          %588 = vmatpush2.msra.mxu0 0.0
          %589 = vmatprep.subr.mxu0 0.0
          %590 = vmatpush2.msra.mxu0 0.0
          %591 = vmatprep.subr.mxu0 0.0
          %592 = vmatpush2.msra.mxu0 0.0
          %593 = vmatprep.subr.mxu0 0.0
          %594 = vmatpush2.msra.mxu0 0.0
          %595 = vmatprep.subr.mxu0 0.0
          %596 = vmatpush2.msra.mxu0 0.0
          %597 = vmatprep.subr.mxu0 0.0
          %598 = vmatpush2.msra.mxu0 0.0
          %599 = vmatprep.subr.mxu0 0.0
          %600 = vmatpush2.msra.mxu0 0.0
          %601 = vmatprep.subr.mxu0 0.0
          %602 = vmatpush2.msra.mxu0 0.0
          %603 = vmatprep.subr.mxu0 0.0
          %604 = vmatpush2.msra.mxu0 0.0
          %605 = vmatprep.subr.mxu0 0.0
          %606 = vmatpush2.msra.mxu0 0.0
          %607 = vmatprep.subr.mxu0 0.0
          %608 = vmatpush2.msra.mxu0 0.0
          %609 = vmatprep.subr.mxu0 0.0
          %610 = vmatpush2.msra.mxu0 0.0
          %611 = vmatprep.subr.mxu0 0.0
          %612 = vmatpush2.msra.mxu0 0.0
          %613 = vmatprep.subr.mxu0 0.0
          %614 = vmatpush2.msra.mxu0 0.0
          %615 = vmatprep.mubr.f32.mxu0 0.0
          %616 = vmatmul.mubr.f32.gmra.mxu0 %v524
          %v617 = vpop.f32.mrf.mxu0
          %v618 = vadd.f32 0.0, %v617
          %v619 = vpop.f32.mrf.mxu0
          %620 = vmatprep.mubr.f32.mxu0 0.0
          %621 = vmatmul.mubr.f32.gmra.mxu0 %v527
          %v622 = vpop.f32.mrf.mxu0
          %v623 = vadd.f32 0.0, %v622
          %v624 = vpop.f32.mrf.mxu0
          %625 = vmatprep.mubr.f32.mxu0 0.0
          %626 = vmatmul.mubr.f32.gmra.mxu0 %v530
          %v627 = vpop.f32.mrf.mxu0
          %v628 = vadd.f32 0.0, %v627
          %v629 = vpop.f32.mrf.mxu0
          %630 = vmatprep.mubr.f32.mxu0 0.0
          %631 = vmatmul.mubr.f32.gmra.mxu0 %v533
          %v632 = vpop.f32.mrf.mxu0
          %v633 = vadd.f32 0.0, %v632
          %v634 = vpop.f32.mrf.mxu0
          %635 = vmatprep.mubr.f32.mxu0 0.0
          %636 = vmatmul.mubr.f32.gmra.mxu0 %v536
          %v637 = vpop.f32.mrf.mxu0
          %v638 = vadd.f32 0.0, %v637
          %v639 = vpop.f32.mrf.mxu0
          %640 = vmatprep.mubr.f32.mxu0 0.0
          %641 = vmatmul.mubr.f32.gmra.mxu0 %v539
          %v642 = vpop.f32.mrf.mxu0
          %v643 = vadd.f32 0.0, %v642
          %v644 = vpop.f32.mrf.mxu0
          %645 = vmatprep.mubr.f32.mxu0 0.0
          %646 = vmatmul.mubr.f32.gmra.mxu0 %v542
          %v647 = vpop.f32.mrf.mxu0
          %v648 = vadd.f32 0.0, %v647
          %v649 = vpop.f32.mrf.mxu0
          %650 = vmatprep.mubr.f32.mxu0 0.0
          %651 = vmatmul.mubr.f32.gmra.mxu0 %v545
          %v652 = vpop.f32.mrf.mxu0
          %v653 = vadd.f32 0.0, %v652
          %v654 = vpop.f32.mrf.mxu0
          %655 = vdwg.mxu0
          %v657 = vsel %vm547, %v442, 0
          %659 = vmatprep.subr.mxu0 0.0
          %660 = vmatpush1.msra.mxu0 0.0
          %661 = vmatprep.subr.mxu0 0.0
          %662 = vmatpush1.msra.mxu0 0.0
          %663 = vmatprep.subr.mxu0 0.0
          %664 = vmatpush1.msra.mxu0 0.0
          %665 = vmatprep.subr.mxu0 0.0
          %666 = vmatpush1.msra.mxu0 0.0
          %667 = vmatprep.subr.mxu0 0.0
          %668 = vmatpush1.msra.mxu0 0.0
          %669 = vmatprep.subr.mxu0 0.0
          %670 = vmatpush1.msra.mxu0 0.0
          %671 = vmatprep.subr.mxu0 0.0
          %672 = vmatpush1.msra.mxu0 0.0
          %673 = vmatprep.subr.mxu0 0.0
          %674 = vmatpush1.msra.mxu0 0.0
          %675 = vmatprep.subr.mxu0 0.0
          %676 = vmatpush1.msra.mxu0 0.0
          %677 = vmatprep.subr.mxu0 0.0
          %678 = vmatpush1.msra.mxu0 0.0
          %679 = vmatprep.subr.mxu0 0.0
          %680 = vmatpush1.msra.mxu0 0.0
          %681 = vmatprep.subr.mxu0 0.0
          %682 = vmatpush1.msra.mxu0 0.0
          %683 = vmatprep.subr.mxu0 0.0
          %684 = vmatpush1.msra.mxu0 0.0
          %685 = vmatprep.subr.mxu0 0.0
          %686 = vmatpush1.msra.mxu0 0.0
          %687 = vmatprep.subr.mxu0 0.0
          %688 = vmatpush1.msra.mxu0 0.0
          %689 = vmatprep.subr.mxu0 0.0
          %690 = vmatpush1.msra.mxu0 %v657
          %691 = vmatprep.subr.mxu0 0.0
          %692 = vmatpush2.msra.mxu0 0.0
          %693 = vmatprep.subr.mxu0 0.0
          %694 = vmatpush2.msra.mxu0 0.0
          %695 = vmatprep.subr.mxu0 0.0
          %696 = vmatpush2.msra.mxu0 0.0
          %697 = vmatprep.subr.mxu0 0.0
          %698 = vmatpush2.msra.mxu0 0.0
          %699 = vmatprep.subr.mxu0 0.0
          %700 = vmatpush2.msra.mxu0 0.0
          %701 = vmatprep.subr.mxu0 0.0
          %702 = vmatpush2.msra.mxu0 0.0
          %703 = vmatprep.subr.mxu0 0.0
          %704 = vmatpush2.msra.mxu0 0.0
          %705 = vmatprep.subr.mxu0 0.0
          %706 = vmatpush2.msra.mxu0 0.0
          %707 = vmatprep.subr.mxu0 0.0
          %708 = vmatpush2.msra.mxu0 0.0
          %709 = vmatprep.subr.mxu0 0.0
          %710 = vmatpush2.msra.mxu0 0.0
          %711 = vmatprep.subr.mxu0 0.0
          %712 = vmatpush2.msra.mxu0 0.0
          %713 = vmatprep.subr.mxu0 0.0
          %714 = vmatpush2.msra.mxu0 0.0
          %715 = vmatprep.subr.mxu0 0.0
          %716 = vmatpush2.msra.mxu0 0.0
          %717 = vmatprep.subr.mxu0 0.0
          %718 = vmatpush2.msra.mxu0 0.0
          %719 = vmatprep.subr.mxu0 0.0
          %720 = vmatpush2.msra.mxu0 0.0
          %721 = vmatprep.subr.mxu0 0.0
          %722 = vmatpush2.msra.mxu0 0.0
          %723 = vmatprep.mubr.f32.mxu0 0.0
          %724 = vmatmul.mubr.f32.gmra.mxu0 %v524
          %v725 = vpop.f32.mrf.mxu0
          %v726 = vadd.f32 %v618, %v725
          %v727 = vpop.f32.mrf.mxu0
          %728 = vmatprep.mubr.f32.mxu0 0.0
          %729 = vmatmul.mubr.f32.gmra.mxu0 %v527
          %v730 = vpop.f32.mrf.mxu0
          %v731 = vadd.f32 %v623, %v730
          %v732 = vpop.f32.mrf.mxu0
          %733 = vmatprep.mubr.f32.mxu0 0.0
          %734 = vmatmul.mubr.f32.gmra.mxu0 %v530
          %v735 = vpop.f32.mrf.mxu0
          %v736 = vadd.f32 %v628, %v735
          %v737 = vpop.f32.mrf.mxu0
          %738 = vmatprep.mubr.f32.mxu0 0.0
          %739 = vmatmul.mubr.f32.gmra.mxu0 %v533
          %v740 = vpop.f32.mrf.mxu0
          %v741 = vadd.f32 %v633, %v740
          %v742 = vpop.f32.mrf.mxu0
          %743 = vmatprep.mubr.f32.mxu0 0.0
          %744 = vmatmul.mubr.f32.gmra.mxu0 %v536
          %v745 = vpop.f32.mrf.mxu0
          %v746 = vadd.f32 %v638, %v745
          %v747 = vpop.f32.mrf.mxu0
          %748 = vmatprep.mubr.f32.mxu0 0.0
          %749 = vmatmul.mubr.f32.gmra.mxu0 %v539
          %v750 = vpop.f32.mrf.mxu0
          %v751 = vadd.f32 %v643, %v750
          %v752 = vpop.f32.mrf.mxu0
          %753 = vmatprep.mubr.f32.mxu0 0.0
          %754 = vmatmul.mubr.f32.gmra.mxu0 %v542
          %v755 = vpop.f32.mrf.mxu0
          %v756 = vadd.f32 %v648, %v755
          %v757 = vpop.f32.mrf.mxu0
          %758 = vmatprep.mubr.f32.mxu0 0.0
          %759 = vmatmul.mubr.f32.gmra.mxu0 %v545
          %v760 = vpop.f32.mrf.mxu0
          %v761 = vadd.f32 %v653, %v760
          %v762 = vpop.f32.mrf.mxu0
          %763 = vdwg.mxu0
          %v764 = vxor.u32 %v726, 2147483648
          %v765 = vxor.u32 %v731, 2147483648
          %v766 = vxor.u32 %v736, 2147483648
          %v767 = vxor.u32 %v741, 2147483648
          %v768 = vxor.u32 %v746, 2147483648
          %v769 = vxor.u32 %v751, 2147483648
          %v770 = vxor.u32 %v756, 2147483648
          %v771 = vxor.u32 %v761, 2147483648
          %v772 = vmul.f32 %v764, 1.442695
          %v773 = vpow.pop %v772
          %v774 = vmul.f32 %v765, 1.442695
          %v775 = vpow.pop %v774
          %v776 = vmul.f32 %v766, 1.442695
          %v777 = vpow.pop %v776
          %v778 = vmul.f32 %v767, 1.442695
          %v779 = vpow.pop %v778
          %v780 = vmul.f32 %v768, 1.442695
          %v781 = vpow.pop %v780
          %v782 = vmul.f32 %v769, 1.442695
          %v783 = vpow.pop %v782
          %v784 = vmul.f32 %v770, 1.442695
          %v785 = vpow.pop %v784
          %v786 = vmul.f32 %v771, 1.442695
          %v787 = vpow.pop %v786
          %v788 = vadd.f32 %v773, 1.0
          %v789 = vadd.f32 %v775, 1.0
          %v790 = vadd.f32 %v777, 1.0
          %v791 = vadd.f32 %v779, 1.0
          %v792 = vadd.f32 %v781, 1.0
          %v793 = vadd.f32 %v783, 1.0
          %v794 = vadd.f32 %v785, 1.0
          %v795 = vadd.f32 %v787, 1.0
          %v796 = vrcp.pop %v788
          %v797 = vmul.f32 1.0, %v796
          %v798 = vrcp.pop %v789
          %v799 = vmul.f32 1.0, %v798
          %v800 = vrcp.pop %v790
          %v801 = vmul.f32 1.0, %v800
          %v802 = vrcp.pop %v791
          %v803 = vmul.f32 1.0, %v802
          %v804 = vrcp.pop %v792
          %v805 = vmul.f32 1.0, %v804
          %v806 = vrcp.pop %v793
          %v807 = vmul.f32 1.0, %v806
          %v808 = vrcp.pop %v794
          %v809 = vmul.f32 1.0, %v808
          %v810 = vrcp.pop %v795
          %v811 = vmul.f32 1.0, %v810
          %vm812 = vcmask 7168
          %813 = vst.msk [vmem:[%s207] sm:$0xff] %vm812, %v797
          %814 = vst.msk [vmem:[%s207 + $0x8] sm:$0xff] %vm812, %v799
          %815 = vst.msk [vmem:[%s207 + $0x10] sm:$0xff] %vm812, %v801
          %816 = vst.msk [vmem:[%s207 + $0x18] sm:$0xff] %vm812, %v803
          %817 = vst.msk [vmem:[%s207 + $0x20] sm:$0xff] %vm812, %v805
          %818 = vst.msk [vmem:[%s207 + $0x28] sm:$0xff] %vm812, %v807
          %819 = vst.msk [vmem:[%s207 + $0x30] sm:$0xff] %vm812, %v809
          %820 = vst.msk [vmem:[%s207 + $0x38] sm:$0xff] %vm812, %v811
        $region44: #{tpu_custom_call.1} parent=31 // pred_fallthru
          _
        %p821 = scmp.lt.s32.totalorder %s21, 1
        %s822 = scalar_select %p821, %s21, 1
        %s823 = smul.addr %s822, 8
        %s824 = smul.addr %s823, 8
        %s825 = scalar_lea.vmem %s3, %s824
        // Predicated region
        $region45: #{tpu_custom_call.1} parent=31 // pred_check
          %p826 = pneg %p117
        $region46: #{tpu_custom_call.1} parent=31 // pred_check_branch
          %828 = sbr.rel (%p826) target = $region48
        $region47: #{tpu_custom_call.1} parent=31 // pred_region
          _
        $region48: #{tpu_custom_call.1} parent=31 // pred_fallthru
          _
      $region32: #{tpu_custom_call.1} parent=5 // pred_fallthru
        _
      %p829 = scmp.le.s32.totalorder 2, %s12
      // Predicated region
      $region49: #{tpu_custom_call.1} parent=5 // pred_check
        %p830 = pneg %p829
      $region50: #{tpu_custom_call.1} parent=5 // pred_check_branch
        %832 = sbr.rel (%p830) target = $region52
      $region51: #{tpu_custom_call.1} parent=5 // pred_region
        %s833 = ssub.s32 %s12, 2
        // Predicated region
        $region53: #{tpu_custom_call.1} parent=51 // pred_check
          %p834 = pneg %p123
        $region54: #{tpu_custom_call.1} parent=51 // pred_check_branch
          %836 = sbr.rel (%p834) target = $region56
        $region55: #{tpu_custom_call.1} parent=51 // pred_region
          %p837 = scmp.lt.s32.totalorder %s23, 1
          %s838 = scalar_select %p837, %s23, 1
          %s839 = smul.addr %s838, 8
          %s840 = smul.addr %s839, 8
          %s841 = scalar_lea.vmem %s3, %s840
        $region56: #{tpu_custom_call.1} parent=51 // pred_fallthru
          _
      $region52: #{tpu_custom_call.1} parent=5 // pred_fallthru
        _
    $region6: #{tpu_custom_call.1} parent=1 // loop_footer
      %s16 = sadd.s32 1, %s12
    $region7: #{tpu_custom_call.1} parent=1 // loop_footer_branch
      %11 = sbr.rel target = $region3
    $region8: #{tpu_custom_call.1} parent=1 // loop_exit
      _
    %842 = vsyncpa [#allocation5], 1
    %s843 = scalar_lea.sflag [#allocation5], 1
    %844 = vsyncpa %s843, 1

</llo_original>
